<compile_context>
chip_gen: v7x
topology: tpu7x:2x2x1
jax: 0.10.0
libtpu: 0.0.40
codegen_flags: <defaults>
</compile_context>

<pallas_src>
import math

import jax
import jax.numpy as jnp
from jax.experimental import pallas as pl
from jax.experimental.pallas import tpu as pltpu


def _copy_kernel(x_ref, o_ref):
    # Straight lane-dense tile copy: HBM -> VMEM -> vreg -> VMEM -> HBM,
    # software-pipelined by the BlockSpec machinery.
    o_ref[...] = x_ref[...]


def _pick_batch_tile(b, flat, itemsize, vmem_budget_bytes=4 << 20):
    """Rows per block, capped so a double-buffered in+out pair fits VMEM on v7x."""
    max_rows = max(1, vmem_budget_bytes // max(1, flat * itemsize))
    if b <= max_rows:
        return b  # full-extent block: always legal w.r.t. the (8,128) rule
    # Otherwise pick a divisor of b that is a multiple of 8 (sublane-aligned).
    tb = (max_rows // 8) * 8
    while tb >= 8:
        if b % tb == 0:
            return tb
        tb -= 8
    return b  # fallback: single full-extent block (still correct)


def flatten_forward(x):
    """Equivalent of FlattenLayerTest.forward: x.reshape(x.shape[0], -1)."""
    b = x.shape[0]
    flat = math.prod(x.shape[1:])

    # Metadata-only flatten of a contiguous row-major array (same memory order
    # as torch.reshape on a contiguous tensor).
    x_flat = jnp.reshape(x, (b, flat))

    tb = _pick_batch_tile(b, flat, jnp.dtype(x_flat.dtype).itemsize)
    grid = (b // tb,)

    return pl.pallas_call(
        _copy_kernel,
        out_shape=jax.ShapeDtypeStruct((b, flat), x_flat.dtype),
        grid=grid,
        # Last dim is full-extent (1024 for the test shape, a multiple of 128)
        # -> lane-dense, unmasked vector stores on every generation.
        in_specs=[pl.BlockSpec((tb, flat), lambda i: (i, 0))],
        out_specs=pl.BlockSpec((tb, flat), lambda i: (i, 0)),
        compiler_params=pltpu.CompilerParams(
            dimension_semantics=("parallel",),
        ),
    )(x_flat)


flatten_forward_jit = jax.jit(flatten_forward)


if __name__ == "__main__":
    key = jax.random.PRNGKey(0)
    batch, channels, height, width = 2, 4, 16, 16
    x = jax.random.normal(key, (batch, channels, height, width), dtype=jnp.float32)

    y = flatten_forward_jit(x)
    y = jax.block_until_ready(y)

    # Sanity checks against reference semantics (torch.reshape == jnp.reshape here).
    assert y.shape == (batch, channels * height * width), y.shape
    ref = jnp.reshape(x, (batch, -1))
    assert jnp.array_equal(y, ref), "mismatch vs reference reshape"

    print("KERNEL_OK")
</pallas_src>

<mosaic_0001>
module attributes {stable_mosaic.version = 11 : i64} {
  func.func @_copy_kernel(%arg0: i32, %arg1: memref<2x1024xf32, #tpu.memory_space<vmem>>, %arg2: memref<2x1024xf32, #tpu.memory_space<vmem>>) attributes {dimension_semantics = [#tpu.dimension_semantics<parallel>], iteration_bounds = array<i64: 1>, scalar_prefetch = 0 : i64, scratch_operands = 0 : i64, tpu.core_type = #tpu.core_type<tc>, window_params = [{transform_indices = @transform_0, window_bounds = array<i64: 2, 1024>}, {transform_indices = @transform_1, window_bounds = array<i64: 2, 1024>}]} {
    %c0 = arith.constant 0 : index
    %c0_0 = arith.constant 0 : index
    %0 = vector.load %arg1[%c0, %c0_0] : memref<2x1024xf32, #tpu.memory_space<vmem>>, vector<2x1024xf32>
    %c0_1 = arith.constant 0 : index
    %c0_2 = arith.constant 0 : index
    %1 = vector.load %arg2[%c0_1, %c0_2] : memref<2x1024xf32, #tpu.memory_space<vmem>>, vector<2x1024xf32>
    tpu.vector_store %arg2[%c0_1, %c0_2], %0 {strides = array<i32>} : memref<2x1024xf32, #tpu.memory_space<vmem>>, vector<2x1024xf32>,
    return
  }
  func.func @transform_0(%arg0: i32) -> (i32, i32) {
    %c0_i32 = arith.constant 0 : i32
    %c0_i32_0 = arith.constant 0 : i32
    return %arg0, %c0_i32 : i32, i32
  }
  func.func @transform_1(%arg0: i32) -> (i32, i32) {
    %c0_i32 = arith.constant 0 : i32
    %c0_i32_0 = arith.constant 0 : i32
    return %arg0, %c0_i32 : i32, i32
  }
}

</mosaic_0001>

<llo_original>
// kernel: flatten_forward.1
$region0: #{flatten_forward.1}
  #allocation0 [shape = 'u32[]', space=smem, size = 0x4, offset = 0x4, fixed_abs, tag = 'smem constant byte address 0x4 - core index']
  #allocation1 [shape = 'u32[144,128]{1,0:T(1,128)}', space=vmem, size = 0x12000, scoped, tag = 'internal scratch']
  %s0 = inlined_call_operand.vmem [shape: f32[2,1024], index: 0, kind: input, shape index: {}]
  %s1 = inlined_call_operand.hbm [shape: f32[2,1024], index: 1, kind: output, shape index: {}]
  %s2 = sld [smem:[#allocation0]]
  $region14: #{flatten_forward.1} parent=0
    _
  %s4 = ssub.s32 1, %s2
  %s5 = scalar_select 0, %s4, %s2
  $region1: #{flatten_forward.1} parent=0
    #allocation2 [shape = 'u8[8192]{0}', space=vmem, size = 0x2000, scoped, tag = 'output window, operand 0, single buffered']
    #allocation3 [shape = 's32[1]{0}', space=sflag, size = 0x4, scoped, tag = 'scoped memory for flatten_forward.1']
    %6 = vsyncpa [#allocation3], 0
    // Predicated region
    $region2: #{flatten_forward.1} parent=1 // pred_check
      _
    $region3: #{flatten_forward.1} parent=1 // pred_check_branch
      %8 = sbr.rel (0) target = $region5
    $region4: #{flatten_forward.1} parent=1 // pred_region
      _
    $region5: #{flatten_forward.1} parent=1 // pred_fallthru
      _
    %v9 = vld [vmem:[%s0] sm:$0xff]
    %v10 = vld [vmem:[%s0 + $0x8] sm:$0xff]
    %11 = vst [vmem:[#allocation2] sm:$0xff] %v9
    %12 = vst [vmem:[#allocation2 + $0x8] sm:$0xff] %v10
    // Predicated region
    $region6: #{flatten_forward.1} parent=1 // pred_check
      _
    $region7: #{flatten_forward.1} parent=1 // pred_check_branch
      %14 = sbr.rel (0) target = $region9
    $region8: #{flatten_forward.1} parent=1 // pred_region
      %s16 = ssub.s32 256, 256
      %17 = vsyncadd [#allocation3], %s16
      %s19 = sshll.u32 [#allocation2], 4
      %s20 = int_to_ptr.vmem [resolvable:$true] %s19
      %22 = dma.vmem_to_hbm [thread:$0]  %s20, 256, %s1, [#allocation3]
    $region9: #{flatten_forward.1} parent=1 // pred_fallthru
      _
    // Predicated region
    $region10: #{flatten_forward.1} parent=1 // pred_check
      _
    $region11: #{flatten_forward.1} parent=1 // pred_check_branch
      %24 = sbr.rel (0) target = $region13
    $region12: #{flatten_forward.1} parent=1 // pred_region
      %25 = dma.done [#allocation3], 256
    $region13: #{flatten_forward.1} parent=1 // pred_fallthru
      _
    %26 = vsyncpa [#allocation3], 1

</llo_original>
